<compile_context>
chip_gen: v7x
topology: tpu7x:2x2x1
jax: 0.10.0
libtpu: 0.0.40
codegen_flags: <defaults>
</compile_context>

<pallas_src>
import collections

import jax
import jax.numpy as jnp
import numpy as np
from jax.experimental import pallas as pl
from jax.experimental.pallas import tpu as pltpu

SUBLANE = 8
LANE = 128
DEFAULT_LANE_WIDTH = 512                 # lane extent of the packed slab
TARGET_MU_BLOCK_BYTES = 4 * 1024 * 1024  # ~4 MiB of mu per grid step (f32)
PAD_VALUE = 1e18                         # padded mu -> q << 0 -> exp(q) == 0
PALLAS_MIN_K = 32768                     # below this, fused jnp wins on launch cost

PackedMu = collections.namedtuple("PackedMu", ["mu", "tile_r", "k"])


def _round_up(n, m):
    return ((n + m - 1) // m) * m


def pack_mu(mu, lane_width=DEFAULT_LANE_WIDTH):
    """Pack (K, 2) means into a lane/sublane-dense (2, R, C) f32 slab.

    Do this ONCE at parameter/init time: it is an HBM copy of mu and must not
    sit on the per-forward path.
    """
    K = int(mu.shape[0])
    C = lane_width if K >= lane_width else _round_up(max(K, 1), LANE)
    rows_needed = pl.cdiv(K, C)

    # Row tile: multiple of 8 sublanes, capped so the mu block is ~4 MiB
    # (double-buffered mu+out stays ~12 MiB: safe on v5e/v6e/v7x defaults).
    target_rows = max(SUBLANE,
                      (TARGET_MU_BLOCK_BYTES // (2 * 4 * C)) // SUBLANE * SUBLANE)
    tile_r = min(_round_up(rows_needed, SUBLANE), target_rows)
    if rows_needed >= 2 * SUBLANE:
        # v7x has 2 TensorCores: keep at least 2 parallel blocks when possible.
        tile_r = min(tile_r, _round_up(pl.cdiv(rows_needed, 2), SUBLANE))
    R = _round_up(rows_needed, tile_r)

    flat = jnp.full((2, R * C), PAD_VALUE, dtype=jnp.float32)
    flat = flat.at[:, :K].set(mu.astype(jnp.float32).T)
    return PackedMu(mu=flat.reshape(2, R, C), tile_r=tile_r, k=K)


def prepare_cov_c(cov, c):
    """Pack the 2x2 covariance and scalar c into one SMEM vector (init time)."""
    cov = jnp.asarray(cov, jnp.float32).reshape(4)
    c = jnp.asarray(c, jnp.float32).reshape(1)
    return jnp.concatenate([cov, c])


def gmm_kernel(x_ref, cov_c_ref, mu_ref, out_ref):
    # x_ref:     (2,)            f32 SMEM   agent position
    # cov_c_ref: (5,)            f32 SMEM   [c00, c01, c10, c11, c]
    # mu_ref:    (2, tile_r, C)  f32 VMEM   packed means (dense tiles)
    # out_ref:   (tile_r, C)     f32 VMEM   per-component Gaussian values
    x0 = x_ref[0]
    x1 = x_ref[1]
    # Fold -0.5 into the quadratic-form coefficients on the scalar unit.
    a0 = -0.5 * cov_c_ref[0]
    a1 = -0.5 * (cov_c_ref[1] + cov_c_ref[2])
    a2 = -0.5 * cov_c_ref[3]
    c = cov_c_ref[4]

    d0 = x0 - mu_ref[0]              # (tile_r, C) dense vregs
    d1 = x1 - mu_ref[1]

    # -0.5 * (d @ cov @ d) in Horner form: 4 VPU muls + 2 adds per vreg.
    q = d0 * (a0 * d0 + a1 * d1) + a2 * (d1 * d1)
    out_ref[...] = c * jnp.exp(q)    # EUP exp, full-lane unmasked store


def gmm_pallas_forward(x, cov_c, packed):
    """Pallas forward. Returns the padded (R, C) slab (padded slots are 0)."""
    mu_packed, tile_r, _ = packed
    _, R, C = mu_packed.shape
    grid = (R // tile_r,)
    return pl.pallas_call(
        gmm_kernel,
        out_shape=jax.ShapeDtypeStruct((R, C), jnp.float32),
        grid=grid,
        in_specs=[
            pl.BlockSpec(memory_space=pltpu.MemorySpace.SMEM),   # x scalars
            pl.BlockSpec(memory_space=pltpu.MemorySpace.SMEM),   # cov + c scalars
            pl.BlockSpec((2, tile_r, C), lambda i: (0, i, 0)),   # mu (dense block)
        ],
        out_specs=pl.BlockSpec((tile_r, C), lambda i: (i, 0)),
        compiler_params=pltpu.CompilerParams(
            dimension_semantics=("parallel",),
            vmem_limit_bytes=32 * 1024 * 1024,
        ),
    )(x.reshape(2).astype(jnp.float32), cov_c.astype(jnp.float32), mu_packed)


def gmm_fused_jnp(x, mu, cov, c=1.0):
    """Fused pure-jnp forward (fast path for tiny K; VPU-only expansion)."""
    mu = mu.astype(jnp.float32)
    cov = jnp.asarray(cov, jnp.float32)
    d0 = x[0] - mu[:, 0]
    d1 = x[1] - mu[:, 1]
    q = cov[0, 0] * d0 * d0 + (cov[0, 1] + cov[1, 0]) * d0 * d1 + cov[1, 1] * d1 * d1
    return c * jnp.exp(-0.5 * q)


def gmm_agent_forward(x, mu, cov, c=1.0, *, packed=None, force_pallas=False):
    """Dispatching forward: tiny K -> fused jnp; large K -> Pallas kernel."""
    K = int(mu.shape[0])
    if not force_pallas and K < PALLAS_MIN_K:
        return gmm_fused_jnp(x, mu, cov, c)
    if packed is None:
        packed = pack_mu(mu)   # NOTE: in real use, pack once at init time.
    out = gmm_pallas_forward(x, prepare_cov_c(cov, c), packed)
    return out.reshape(-1)[:K]   # (K,) API only; prefer consuming the padded slab


def reference_numpy(x, mu, cov, c=1.0):
    """Exact PyTorch formula, float64 numpy (test oracle)."""
    d = np.asarray(x, np.float64)[None, :] - np.asarray(mu, np.float64)
    q = d @ np.asarray(cov, np.float64) @ d.T
    return (c * np.exp(-0.5 * np.diagonal(q))).astype(np.float32)


if __name__ == "__main__":
    key = jax.random.PRNGKey(0)
    _, k_x = jax.random.split(key)

    # GMMAgent.__init__: 8 unit-circle means, x ~ 0.01*N(0,1), cov = 0.54*I, c = 1.
    K = 8
    angles = jnp.arange(K, dtype=jnp.float32) * (2.0 * jnp.pi / K)
    mu = jnp.stack([jnp.cos(angles), jnp.sin(angles)], axis=1)     # (K, 2)
    x = 0.01 * jax.random.normal(k_x, (2,), dtype=jnp.float32)     # self.x
    cov = 0.54 * jnp.eye(2, dtype=jnp.float32)                     # self.cov
    c = 1.0                                                        # self.c

    # Init-time packing (kept off the per-forward path).
    packed = pack_mu(mu)
    cov_c = prepare_cov_c(cov, c)

    # Run the Pallas kernel once.
    out_slab = jax.block_until_ready(gmm_pallas_forward(x, cov_c, packed))
    out_np = np.asarray(out_slab).reshape(-1)
    ref_np = reference_numpy(x, mu, cov, c)
    np.testing.assert_allclose(out_np[:K], ref_np, rtol=1e-5, atol=1e-6)
    assert np.all(out_np[K:] <= 1e-30)          # padded tail underflows to 0

    # Exercise the multi-row sublane-dense layout with a larger K.
    K2 = 2048
    mu2 = jax.random.normal(jax.random.PRNGKey(1), (K2, 2), dtype=jnp.float32)
    packed2 = pack_mu(mu2)
    out2_slab = jax.block_until_ready(gmm_pallas_forward(x, cov_c, packed2))
    out2_np = np.asarray(out2_slab).reshape(-1)
    ref2_np = reference_numpy(x, mu2, cov, c)
    np.testing.assert_allclose(out2_np[:K2], ref2_np, rtol=1e-5, atol=1e-6)

    # Dispatching wrapper (small-K fused-jnp fast path) also matches.
    disp = jax.block_until_ready(gmm_agent_forward(x, mu, cov, c))
    np.testing.assert_allclose(np.asarray(disp), ref_np, rtol=1e-5, atol=1e-6)

    print("KERNEL_OK")
</pallas_src>

<mosaic_0001>
module attributes {stable_mosaic.version = 11 : i64} {
  func.func @gmm_kernel(%arg0: i32, %arg1: memref<2xf32, #tpu.memory_space<smem>>, %arg2: memref<5xf32, #tpu.memory_space<smem>>, %arg3: memref<2x8x128xf32, #tpu.memory_space<vmem>>, %arg4: memref<8x128xf32, #tpu.memory_space<vmem>>) attributes {dimension_semantics = [#tpu.dimension_semantics<parallel>], iteration_bounds = array<i64: 1>, scalar_prefetch = 0 : i64, scratch_operands = 0 : i64, tpu.core_type = #tpu.core_type<tc>, window_params = [{transform_indices = @transform_0, window_bounds = array<i64: 2>}, {transform_indices = @transform_1, window_bounds = array<i64: 5>}, {transform_indices = @transform_2, window_bounds = array<i64: 2, 8, 128>}, {transform_indices = @transform_3, window_bounds = array<i64: 8, 128>}]} {
    %c0 = arith.constant 0 : index
    %0 = memref.load %arg1[%c0] : memref<2xf32, #tpu.memory_space<smem>>
    %c1 = arith.constant 1 : index
    %1 = memref.load %arg1[%c1] : memref<2xf32, #tpu.memory_space<smem>>
    %c0_0 = arith.constant 0 : index
    %2 = memref.load %arg2[%c0_0] : memref<5xf32, #tpu.memory_space<smem>>
    %cst = arith.constant -5.000000e-01 : f32
    %3 = arith.mulf %cst, %2 : f32
    %c1_1 = arith.constant 1 : index
    %4 = memref.load %arg2[%c1_1] : memref<5xf32, #tpu.memory_space<smem>>
    %c2 = arith.constant 2 : index
    %5 = memref.load %arg2[%c2] : memref<5xf32, #tpu.memory_space<smem>>
    %6 = arith.addf %4, %5 : f32
    %cst_2 = arith.constant -5.000000e-01 : f32
    %7 = arith.mulf %cst_2, %6 : f32
    %c3 = arith.constant 3 : index
    %8 = memref.load %arg2[%c3] : memref<5xf32, #tpu.memory_space<smem>>
    %cst_3 = arith.constant -5.000000e-01 : f32
    %9 = arith.mulf %cst_3, %8 : f32
    %c4 = arith.constant 4 : index
    %10 = memref.load %arg2[%c4] : memref<5xf32, #tpu.memory_space<smem>>
    %c0_4 = arith.constant 0 : index
    %c0_5 = arith.constant 0 : index
    %c0_6 = arith.constant 0 : index
    %11 = vector.load %arg3[%c0_4, %c0_5, %c0_6] : memref<2x8x128xf32, #tpu.memory_space<vmem>>, vector<1x8x128xf32>
    %12 = vector.shape_cast %11 : vector<1x8x128xf32> to vector<8x128xf32>
    %13 = vector.broadcast %0 : f32 to vector<8x128xf32>
    %14 = arith.subf %13, %12 : vector<8x128xf32>
    %c1_7 = arith.constant 1 : index
    %c0_8 = arith.constant 0 : index
    %c0_9 = arith.constant 0 : index
    %15 = vector.load %arg3[%c1_7, %c0_8, %c0_9] : memref<2x8x128xf32, #tpu.memory_space<vmem>>, vector<1x8x128xf32>
    %16 = vector.shape_cast %15 : vector<1x8x128xf32> to vector<8x128xf32>
    %17 = vector.broadcast %1 : f32 to vector<8x128xf32>
    %18 = arith.subf %17, %16 : vector<8x128xf32>
    %19 = vector.broadcast %3 : f32 to vector<8x128xf32>
    %20 = arith.mulf %19, %14 : vector<8x128xf32>
    %21 = vector.broadcast %7 : f32 to vector<8x128xf32>
    %22 = arith.mulf %21, %18 : vector<8x128xf32>
    %23 = arith.addf %20, %22 : vector<8x128xf32>
    %24 = arith.mulf %14, %23 : vector<8x128xf32>
    %25 = arith.mulf %18, %18 : vector<8x128xf32>
    %26 = vector.broadcast %9 : f32 to vector<8x128xf32>
    %27 = arith.mulf %26, %25 : vector<8x128xf32>
    %28 = arith.addf %24, %27 : vector<8x128xf32>
    %29 = math.exp %28 : vector<8x128xf32>
    %30 = vector.broadcast %10 : f32 to vector<8x128xf32>
    %31 = arith.mulf %30, %29 : vector<8x128xf32>
    %c0_10 = arith.constant 0 : index
    %c0_11 = arith.constant 0 : index
    %32 = vector.load %arg4[%c0_10, %c0_11] : memref<8x128xf32, #tpu.memory_space<vmem>>, vector<8x128xf32>
    tpu.vector_store %arg4[%c0_10, %c0_11], %31 {strides = array<i32>} : memref<8x128xf32, #tpu.memory_space<vmem>>, vector<8x128xf32>,
    return
  }
  func.func @transform_0(%arg0: i32) -> i32 {
    %c0_i32 = arith.constant 0 : i32
    %c0_i32_0 = arith.constant 0 : i32
    return %c0_i32 : i32
  }
  func.func @transform_1(%arg0: i32) -> i32 {
    %c0_i32 = arith.constant 0 : i32
    %c0_i32_0 = arith.constant 0 : i32
    return %c0_i32 : i32
  }
  func.func @transform_2(%arg0: i32) -> (i32, i32, i32) {
    %c0_i32 = arith.constant 0 : i32
    %c0_i32_0 = arith.constant 0 : i32
    %c0_i32_1 = arith.constant 0 : i32
    return %c0_i32, %arg0, %c0_i32_0 : i32, i32, i32
  }
  func.func @transform_3(%arg0: i32) -> (i32, i32) {
    %c0_i32 = arith.constant 0 : i32
    %c0_i32_0 = arith.constant 0 : i32
    return %arg0, %c0_i32 : i32, i32
  }
}

</mosaic_0001>

<llo_original>
// kernel: tpu_custom_call.1
$region0: #{tpu_custom_call.1}
  #allocation0 [shape = 'u32[]', space=smem, size = 0x4, offset = 0x4, fixed_abs, tag = 'smem constant byte address 0x4 - core index']
  #allocation1 [shape = 'u32[144,128]{1,0:T(1,128)}', space=vmem, size = 0x12000, scoped, tag = 'internal scratch']
  %s0 = inlined_call_operand.hbm [shape: f32[2], index: 0, kind: input, shape index: {}]
  %s1 = inlined_call_operand.vmem [shape: f32[5], index: 1, kind: input, shape index: {}]
  %s2 = inlined_call_operand.hbm [shape: f32[2,8,128], index: 2, kind: input, shape index: {}]
  %s3 = inlined_call_operand.hbm [shape: f32[8,128], index: 3, kind: output, shape index: {}]
  %s4 = sld [smem:[#allocation0]]
  $region34: #{tpu_custom_call.1} parent=0
    _
  %s6 = ssub.s32 1, %s4
  %s7 = scalar_select 0, %s6, %s4
  $region1: #{tpu_custom_call.1} parent=0
    #allocation2 [shape = 'u8[512]{0}', space=smem, size = 0x200, scoped, tag = 'input window, operand 0, single buffered']
    #allocation3 [shape = 's32[1]{0}', space=sflag, size = 0x4, scoped, tag = 'scoped memory for tpu_custom_call.1']
    #allocation4 [shape = 's32[1]{0}', space=sflag, size = 0x4, scoped, tag = 'scoped memory for tpu_custom_call.1']
    #allocation5 [shape = 's32[1]{0}', space=sflag, size = 0x4, scoped, tag = 'scoped memory for tpu_custom_call.1']
    #allocation6 [shape = 's32[1]{0}', space=sflag, size = 0x4, scoped, tag = 'scoped memory for tpu_custom_call.1']
    #allocation7 [shape = 'u8[512]{0}', space=smem, size = 0x200, scoped, tag = 'input window, operand 1, single buffered']
    #allocation8 [shape = 'u8[8192]{0}', space=vmem, size = 0x2000, scoped, tag = 'input window, operand 2, single buffered']
    #allocation9 [shape = 'u8[4096]{0}', space=vmem, size = 0x1000, scoped, tag = 'output window, operand 0, single buffered']
    %8 = vsyncpa [#allocation5], 0
    %9 = vsyncpa [#allocation6], 0
    %10 = vsyncpa [#allocation3], 0
    %11 = vsyncpa [#allocation4], 0
    // Predicated region
    $region2: #{tpu_custom_call.1} parent=1 // pred_check
      _
    $region3: #{tpu_custom_call.1} parent=1 // pred_check_branch
      %13 = sbr.rel (0) target = $region5
    $region4: #{tpu_custom_call.1} parent=1 // pred_region
      %s15 = ssub.s32 16, 16
      %16 = vsyncadd [#allocation5], %s15
      %19 = dma.hbm_to_smem %s0, 16, [#allocation2], [#allocation5]
    $region5: #{tpu_custom_call.1} parent=1 // pred_fallthru
      _
    // Predicated region
    $region6: #{tpu_custom_call.1} parent=1 // pred_check
      _
    $region7: #{tpu_custom_call.1} parent=1 // pred_check_branch
      %21 = sbr.rel (0) target = $region9
    $region8: #{tpu_custom_call.1} parent=1 // pred_region
      %s23 = ssub.s32 16, 16
      %24 = vsyncadd [#allocation6], %s23
      %s26 = sshll.u32 %s1, 4
      %s27 = int_to_ptr.vmem [resolvable:$true] %s26
      %29 = dma.vmem_to_smem %s27, 16, [#allocation7], [#allocation6]
    $region9: #{tpu_custom_call.1} parent=1 // pred_fallthru
      _
    // Predicated region
    $region10: #{tpu_custom_call.1} parent=1 // pred_check
      _
    $region11: #{tpu_custom_call.1} parent=1 // pred_check_branch
      %31 = sbr.rel (0) target = $region13
    $region12: #{tpu_custom_call.1} parent=1 // pred_region
      %s33 = ssub.s32 256, 256
      %34 = vsyncadd [#allocation3], %s33
      %s35 = sshll.u32 [#allocation8], 4
      %s36 = int_to_ptr.vmem [resolvable:$true] %s35
      %41 = dma.hbm_to_vmem [thread:$0]  %s2, 256, %s36, [#allocation3], 128, 128, 8
    $region13: #{tpu_custom_call.1} parent=1 // pred_fallthru
      _
    // Predicated region
    $region14: #{tpu_custom_call.1} parent=1 // pred_check
      _
    $region15: #{tpu_custom_call.1} parent=1 // pred_check_branch
      %43 = sbr.rel (0) target = $region17
    $region16: #{tpu_custom_call.1} parent=1 // pred_region
      %44 = dma.done [#allocation5], 16
    $region17: #{tpu_custom_call.1} parent=1 // pred_fallthru
      _
    // Predicated region
    $region18: #{tpu_custom_call.1} parent=1 // pred_check
      _
    $region19: #{tpu_custom_call.1} parent=1 // pred_check_branch
      %46 = sbr.rel (0) target = $region21
    $region20: #{tpu_custom_call.1} parent=1 // pred_region
      %47 = dma.done [#allocation6], 16
    $region21: #{tpu_custom_call.1} parent=1 // pred_fallthru
      _
    // Predicated region
    $region22: #{tpu_custom_call.1} parent=1 // pred_check
      _
    $region23: #{tpu_custom_call.1} parent=1 // pred_check_branch
      %49 = sbr.rel (0) target = $region25
    $region24: #{tpu_custom_call.1} parent=1 // pred_region
      %50 = dma.done [#allocation3], 256
    $region25: #{tpu_custom_call.1} parent=1 // pred_fallthru
      _
    %51 = sfence
    %s52 = sld [smem:[#allocation2]]
    %s53 = sld [smem:[#allocation2 + $0x1]]
    %s54 = sld [smem:[#allocation7]]
    %s55 = smul.f32 %s54, -0.5
    %s56 = sld [smem:[#allocation7 + $0x1]]
    %s57 = sld [smem:[#allocation7 + $0x2]]
    %s58 = sadd.f32 %s56, %s57
    %s59 = smul.f32 %s58, -0.5
    %s60 = sld [smem:[#allocation7 + $0x3]]
    %s61 = smul.f32 %s60, -0.5
    %s62 = sld [smem:[#allocation7 + $0x4]]
    %v63 = vld [vmem:[#allocation8] sm:$0xff]
    %v64 = vstv %s52
    %v65 = vsub.f32 %v64, %v63
    %s66 = scalar_lea.vmem [#allocation8], 8
    %v67 = vld [vmem:[%s66] sm:$0xff]
    %v68 = vstv %s53
    %v69 = vsub.f32 %v68, %v67
    %v70 = vstv %s55
    %v71 = vmul.f32 %v70, %v65
    %v72 = vstv %s59
    %v73 = vmul.f32 %v72, %v69
    %v74 = vadd.f32 %v71, %v73
    %v75 = vmul.f32 %v65, %v74
    %v76 = vmul.f32 %v69, %v69
    %v77 = vstv %s61
    %v78 = vmul.f32 %v77, %v76
    %v79 = vadd.f32 %v75, %v78
    %v80 = vmul.f32 %v79, 1.442695
    %v81 = vpow.pop %v80
    %v82 = vstv %s62
    %v83 = vmul.f32 %v82, %v81
    %84 = vst [vmem:[#allocation9] sm:$0xff] %v83
    // Predicated region
    $region26: #{tpu_custom_call.1} parent=1 // pred_check
      _
    $region27: #{tpu_custom_call.1} parent=1 // pred_check_branch
      %86 = sbr.rel (0) target = $region29
    $region28: #{tpu_custom_call.1} parent=1 // pred_region
      %s88 = ssub.s32 128, 128
      %89 = vsyncadd [#allocation4], %s88
      %s91 = sshll.u32 [#allocation9], 4
      %s92 = int_to_ptr.vmem [resolvable:$true] %s91
      %94 = dma.vmem_to_hbm [thread:$0]  %s92, 128, %s3, [#allocation4]
    $region29: #{tpu_custom_call.1} parent=1 // pred_fallthru
      _
    // Predicated region
    $region30: #{tpu_custom_call.1} parent=1 // pred_check
      _
    $region31: #{tpu_custom_call.1} parent=1 // pred_check_branch
      %96 = sbr.rel (0) target = $region33
    $region32: #{tpu_custom_call.1} parent=1 // pred_region
      %97 = dma.done [#allocation4], 128
    $region33: #{tpu_custom_call.1} parent=1 // pred_fallthru
      _
    %98 = vsyncpa [#allocation3], 1
    %99 = vsyncpa [#allocation4], 1
    %100 = vsyncpa [#allocation5], 1
    %101 = vsyncpa [#allocation6], 1

</llo_original>
